<compile_context>
chip_gen: v5e
topology: v5e:2x2
jax: 0.10.0
libtpu: 0.0.40
codegen_flags: <defaults>
</compile_context>

<pallas_src>
import jax
import jax.numpy as jnp
import numpy as np
from jax.experimental import pallas as pl
from jax.experimental.pallas import tpu as pltpu


def _round_up(x, m):
    return ((x + m - 1) // m) * m


def _pick_batch_tile(B, batch_tile):
    """Batch tile that is (a) a multiple of 8 or == B, (b) splits B into >=2
    grid steps whenever possible so "parallel" can shard across v7x's 2 TCs."""
    batch_tile = max(8, _round_up(batch_tile, 8))
    if B <= 8:
        return B                                   # single tiny tile (block == full dim)
    if B <= batch_tile:
        return _round_up(pl.cdiv(B, 2), 8)         # split into two tiles
    return batch_tile


# ----------------------------------------------------------------------------
# Pallas kernel: one batch tile (TB batch elements) per grid step.
# ----------------------------------------------------------------------------
def _bottom_up_attention_kernel(
    feats_ref,   # (TB, R, Fp) bf16  region features (zero-padded along F only)
    gate_ref,    # (TB, Hp)    f32   fc1_context(context) + bias, hoisted out of kernel
    mask_ref,    # (TB, R)     f32   additive mask: fc2 bias where valid, -1e30 where masked
    wf_ref,      # (Fp, Hp)    bf16  fc1_feature weight (pre-transposed, zero-padded)
    bf_ref,      # (1, Hp)     f32   fc1_feature bias
    w2_ref,      # (1, Hp)     f32   fc2 weight row (zero-padded)
    att_ref,     # out: (TB, Fp) f32 attended features (lane-dense)
    attn_ref,    # out: (TB, R)  f32 attention weights
):
    TB, R, Fp = feats_ref.shape
    Hp = gate_ref.shape[-1]

    feats = feats_ref[...]                        # (TB, R, Fp) bf16
    gate = gate_ref[...]                          # (TB, Hp)    f32
    mask_add = mask_ref[...]                      # (TB, R)     f32

    # fc1_feature for the whole batch tile: one bf16 MXU matmul, f32 accumulate.
    x_feat = jnp.dot(feats.reshape(TB * R, Fp), wf_ref[...],
                     preferred_element_type=jnp.float32) + bf_ref[...]      # (TB*R, Hp)
    x = x_feat.reshape(TB, R, Hp) * gate[:, None, :]                        # context gating

    # fc2(L2-normalize(x)) folded into one per-region scalar:
    #   logits = <x, w2> * rsqrt(<x, x>)   (identical math, no full-tensor normalize)
    ss = jnp.sum(x * x, axis=-1)                                            # (TB, R)
    raw = jnp.sum(x * w2_ref[...][None, :, :], axis=-1)                     # (TB, R)
    logits = raw * jax.lax.rsqrt(ss + 1e-12) + mask_add                     # + fc2 bias / -1e30 mask

    # masked softmax over regions (exact normalization: denom is only (TB, 1)).
    m = jnp.max(logits, axis=-1, keepdims=True)
    e = jnp.exp(logits - m)
    attn = e / jnp.sum(e, axis=-1, keepdims=True)                           # (TB, R) f32
    attn_ref[...] = attn

    # Attention-weighted pooling == torch.bmm(attention, feats): batched
    # (1, R) x (R, Fp) MXU matmul with f32 accumulation — no (TB, R, Fp)
    # broadcast temporary in VMEM.
    pooled = jnp.einsum("bqr,brf->bqf",
                        attn[:, None, :].astype(feats.dtype), feats,
                        preferred_element_type=jnp.float32)                 # (TB, 1, Fp)
    att_ref[...] = pooled.reshape(TB, Fp)


def bottom_up_attention_pallas(feats_p, context, no_object_mask, params, *, batch_tile=64):
    """feats_p: (B, R, Fp) bf16 (F already zero-padded to a multiple of 128);
    context: (B, C) f32; no_object_mask: (B, R) bool."""
    B, R, Fp = feats_p.shape
    F, H = params["wf_t"].shape
    f32, bf16 = jnp.float32, jnp.bfloat16
    Hp = _round_up(H, 128)

    # Hoisted tiny context projection (B,C)x(C,H): plain-JAX matmul.
    gate = context.astype(f32) @ params["wc_t"] + params["bc"]              # (B, H)
    gate_p = jnp.zeros((B, Hp), f32).at[:, :H].set(gate)

    # Additive region mask: fc2 bias where valid, -1e30 where masked (NaN-safe).
    b2 = params["b2"].reshape(())
    mask_add = jnp.where(no_object_mask, jnp.asarray(-1e30, f32), b2.astype(f32))

    # Weight blocks are small; pad once to lane-aligned shapes.
    wf_p = jnp.zeros((Fp, Hp), bf16).at[:F, :H].set(params["wf_t"].astype(bf16))
    bf_p = jnp.zeros((1, Hp), f32).at[:, :H].set(params["bf"])
    w2_p = jnp.zeros((1, Hp), f32).at[:, :H].set(params["w2_t"].reshape(1, H))

    TB = _pick_batch_tile(B, batch_tile)
    num_tiles = pl.cdiv(B, TB)      # partial last block: OOB rows are discarded

    batch_map3 = lambda b: (b, 0, 0)
    batch_map2 = lambda b: (b, 0)
    const_map2 = lambda b: (0, 0)

    att_p, attn = pl.pallas_call(
        _bottom_up_attention_kernel,
        out_shape=(
            jax.ShapeDtypeStruct((B, Fp), f32),
            jax.ShapeDtypeStruct((B, R), f32),
        ),
        grid_spec=pltpu.PrefetchScalarGridSpec(
            num_scalar_prefetch=0,
            grid=(num_tiles,),
            in_specs=[
                pl.BlockSpec((TB, R, Fp), batch_map3),     # feats (bf16, F-padded)
                pl.BlockSpec((TB, Hp), batch_map2),        # hoisted context gate
                pl.BlockSpec((TB, R), batch_map2),         # additive mask (+fc2 bias)
                # Constant-index operands: single-buffered (double-buffering them
                # only wastes VMEM).
                pl.BlockSpec((Fp, Hp), const_map2, pipeline_mode=pl.Buffered(1)),
                pl.BlockSpec((1, Hp), const_map2, pipeline_mode=pl.Buffered(1)),
                pl.BlockSpec((1, Hp), const_map2, pipeline_mode=pl.Buffered(1)),
            ],
            out_specs=[
                pl.BlockSpec((TB, Fp), batch_map2),        # attended feats (lane-dense)
                pl.BlockSpec((TB, R), batch_map2),         # attention weights (tiny)
            ],
        ),
        compiler_params=pltpu.CompilerParams(
            dimension_semantics=("parallel",),
            vmem_limit_bytes=48 << 20,   # above 16/32 MiB default scoped limits, < v7x physical
        ),
    )(feats_p, gate_p, mask_add, wf_p, bf_p, w2_p)

    attended_feats = att_p[:, :F]                 # slice F padding back off
    attention = attn.reshape(B, 1, R)             # matches unsqueeze(1)
    return attended_feats, attention


# ----------------------------------------------------------------------------
# Module parameters (deterministic init) + plain-JAX glue for embeddings/concat.
# ----------------------------------------------------------------------------
def init_params(key, context_size, object_embedding_size, attribute_embedding_size,
                hidden_size, num_objects, num_attributes, image_feature_size):
    feature_size = (image_feature_size + object_embedding_size
                    + attribute_embedding_size + 1 + 5)
    ks = jax.random.split(key, 8)

    def uniform(k, shape, fan_in):
        bound = 1.0 / np.sqrt(fan_in)
        return jax.random.uniform(k, shape, jnp.float32, -bound, bound)

    params = {
        "object_embedding": jax.random.normal(
            ks[0], (num_objects, object_embedding_size), jnp.float32),
        "attribute_embedding": jax.random.normal(
            ks[1], (num_attributes, attribute_embedding_size), jnp.float32),
        # Linear weights stored pre-transposed (in_features, out_features).
        "wc_t": uniform(ks[2], (context_size, hidden_size), context_size),
        "bc": uniform(ks[3], (1, hidden_size), context_size),
        "wf_t": uniform(ks[4], (feature_size, hidden_size), feature_size),
        "bf": uniform(ks[5], (1, hidden_size), feature_size),
        "w2_t": uniform(ks[6], (hidden_size, 1), hidden_size),
        "b2": uniform(ks[7], (1, 1), hidden_size),
    }
    return params, feature_size


def bottom_up_forward(params, cls_prob, image_features, spatial_features,
                      object_indices, attribute_indices, no_object_mask, context):
    # TODO(synk): embedding gathers + concat stay in plain JAX (no rectangular
    # BlockSpec form for the gather); everything downstream runs in the kernel.
    attr_emb = jnp.take(params["attribute_embedding"], attribute_indices, axis=0)
    obj_emb = jnp.take(params["object_embedding"], object_indices, axis=0)
    B, R = cls_prob.shape
    F = params["wf_t"].shape[0]
    Fp = _round_up(F, 128)
    parts = [cls_prob[..., None], image_features, attr_emb, obj_emb, spatial_features]
    if Fp > F:
        parts.append(jnp.zeros((B, R, Fp - F), jnp.float32))
    # Single concat emits feats already lane-padded and in bf16 — no extra
    # HBM zero-pad/copy pass over the largest tensor.
    feats_p = jnp.concatenate([p.astype(jnp.bfloat16) for p in parts], axis=2)
    attended_feats, attention = bottom_up_attention_pallas(
        feats_p, context, no_object_mask, params)
    return attended_feats, attention, feats_p


# ----------------------------------------------------------------------------
# Pure-JAX reference (mirrors the PyTorch forward) for a correctness check.
# ----------------------------------------------------------------------------
def reference_forward(params, feats, context, no_object_mask):
    hi = jax.lax.Precision.HIGHEST
    x_ctx = context @ params["wc_t"] + params["bc"]                     # same path as wrapper
    x_feat = jnp.einsum("brf,fh->brh", feats, params["wf_t"], precision=hi) + params["bf"]
    x = x_ctx[:, None, :] * x_feat
    x = x / jnp.linalg.norm(x, axis=2, keepdims=True)
    logits = jnp.einsum("brh,ho->bro", x, params["w2_t"], precision=hi)[..., 0] + params["b2"][0, 0]
    logits = jnp.where(no_object_mask, -jnp.inf, logits)
    attention = jax.nn.softmax(logits, axis=1)[:, None, :]              # (B, 1, R)
    attended = jnp.einsum("bor,brf->bof", attention, feats, precision=hi)[:, 0]
    return attended, attention


if __name__ == "__main__":
    # Small, forward-consistent shapes.
    B, R = 2, 8
    context_size = 32
    object_embedding_size = 16
    attribute_embedding_size = 16
    hidden_size = 32
    num_objects = 10
    num_attributes = 10
    image_feature_size = 64

    key = jax.random.PRNGKey(0)
    kp, k1, k2, k3, k4, k5, k6 = jax.random.split(key, 7)

    params, feature_size = init_params(
        kp, context_size, object_embedding_size, attribute_embedding_size,
        hidden_size, num_objects, num_attributes, image_feature_size)

    cls_prob = jax.random.uniform(k1, (B, R), jnp.float32)
    image_features = jax.random.normal(k2, (B, R, image_feature_size), jnp.float32)
    spatial_features = jax.random.normal(k3, (B, R, 5), jnp.float32)
    object_indices = jax.random.randint(k4, (B, R), 0, num_objects)
    attribute_indices = jax.random.randint(k5, (B, R), 0, num_attributes)
    context = jax.random.normal(k6, (B, context_size), jnp.float32)
    no_object_mask = jnp.array(
        [[0, 0, 0, 0, 0, 0, 1, 1],
         [0, 0, 0, 0, 0, 0, 0, 0]], dtype=bool)

    attended_feats, attention, feats_p = bottom_up_forward(
        params, cls_prob, image_features, spatial_features,
        object_indices, attribute_indices, no_object_mask, context)
    attended_feats = jax.block_until_ready(attended_feats)
    attention = jax.block_until_ready(attention)

    # Correctness check against the pure-JAX reference.  The reference is fed the
    # same bf16-rounded feats / fc1 weight the kernel consumes (the bf16 cast is a
    # documented perf tradeoff); the remaining tolerance covers the bf16 cast of
    # the attention weights in the MXU pooling and accumulation-order noise.
    feats_ref = feats_p[:, :, :feature_size].astype(jnp.float32)
    params_ref = dict(params,
                      wf_t=params["wf_t"].astype(jnp.bfloat16).astype(jnp.float32))
    ref_attended, ref_attention = reference_forward(
        params_ref, feats_ref, context, no_object_mask)

    assert attended_feats.shape == (B, feature_size)
    assert attention.shape == (B, 1, R)
    np.testing.assert_allclose(np.asarray(attention), np.asarray(ref_attention),
                               rtol=2e-3, atol=2e-3)
    np.testing.assert_allclose(np.asarray(attended_feats), np.asarray(ref_attended),
                               rtol=1e-2, atol=2e-2)

    print("KERNEL_OK")
</pallas_src>

<mosaic_0001>
module attributes {stable_mosaic.version = 11 : i64} {
  func.func @_bottom_up_attention_kernel(%arg0: i32, %arg1: memref<2x8x128xbf16, #tpu.memory_space<vmem>>, %arg2: memref<2x128xf32, #tpu.memory_space<vmem>>, %arg3: memref<2x8xf32, #tpu.memory_space<vmem>>, %arg4: memref<128x128xbf16, #tpu.memory_space<vmem>>, %arg5: memref<1x128xf32, #tpu.memory_space<vmem>>, %arg6: memref<1x128xf32, #tpu.memory_space<vmem>>, %arg7: memref<2x128xf32, #tpu.memory_space<vmem>>, %arg8: memref<2x8xf32, #tpu.memory_space<vmem>>) attributes {dimension_semantics = [#tpu.dimension_semantics<parallel>], iteration_bounds = array<i64: 1>, scalar_prefetch = 0 : i64, scratch_operands = 0 : i64, tpu.core_type = #tpu.core_type<tc>, window_params = [{transform_indices = @transform_0, window_bounds = array<i64: 2, 8, 128>}, {transform_indices = @transform_1, window_bounds = array<i64: 2, 128>}, {transform_indices = @transform_2, window_bounds = array<i64: 2, 8>}, {pipeline_mode = #tpu.pipeline_mode<synchronous>, transform_indices = @transform_3, window_bounds = array<i64: 128, 128>}, {pipeline_mode = #tpu.pipeline_mode<synchronous>, transform_indices = @transform_4, window_bounds = array<i64: 1, 128>}, {pipeline_mode = #tpu.pipeline_mode<synchronous>, transform_indices = @transform_5, window_bounds = array<i64: 1, 128>}, {transform_indices = @transform_6, window_bounds = array<i64: 2, 128>}, {transform_indices = @transform_7, window_bounds = array<i64: 2, 8>}]} {
    %c0 = arith.constant 0 : index
    %c0_0 = arith.constant 0 : index
    %c0_1 = arith.constant 0 : index
    %0 = vector.load %arg1[%c0, %c0_0, %c0_1] : memref<2x8x128xbf16, #tpu.memory_space<vmem>>, vector<2x8x128xbf16>
    %c0_2 = arith.constant 0 : index
    %c0_3 = arith.constant 0 : index
    %1 = vector.load %arg2[%c0_2, %c0_3] : memref<2x128xf32, #tpu.memory_space<vmem>>, vector<2x128xf32>
    %c0_4 = arith.constant 0 : index
    %c0_5 = arith.constant 0 : index
    %2 = vector.load %arg3[%c0_4, %c0_5] : memref<2x8xf32, #tpu.memory_space<vmem>>, vector<2x8xf32>
    %3 = vector.shape_cast %0 : vector<2x8x128xbf16> to vector<16x128xbf16>
    %c0_6 = arith.constant 0 : index
    %c0_7 = arith.constant 0 : index
    %4 = vector.load %arg4[%c0_6, %c0_7] : memref<128x128xbf16, #tpu.memory_space<vmem>>, vector<128x128xbf16>
    %cst = arith.constant dense<0.000000e+00> : vector<16x128xf32>
    %5 = tpu.matmul %3, %4, %cst {dimension_numbers = #tpu.dot_dimension_numbers<[1], [0], [0], [1], [0, 0, 1, 1], [], []>} : vector<16x128xbf16>, vector<128x128xbf16>, vector<16x128xf32> -> vector<16x128xf32>
    %c0_8 = arith.constant 0 : index
    %c0_9 = arith.constant 0 : index
    %6 = vector.load %arg5[%c0_8, %c0_9] : memref<1x128xf32, #tpu.memory_space<vmem>>, vector<1x128xf32>
    %7 = vector.broadcast %6 : vector<1x128xf32> to vector<16x128xf32>
    %8 = arith.addf %5, %7 : vector<16x128xf32>
    %9 = vector.shape_cast %8 : vector<16x128xf32> to vector<2x8x128xf32>
    %10 = vector.shape_cast %1 : vector<2x128xf32> to vector<2x1x128xf32>
    %11 = vector.broadcast %10 : vector<2x1x128xf32> to vector<2x8x128xf32>
    %12 = arith.mulf %9, %11 : vector<2x8x128xf32>
    %13 = arith.mulf %12, %12 : vector<2x8x128xf32>
    %cst_10 = arith.constant dense<0.000000e+00> : vector<2x8xf32>
    %14 = vector.multi_reduction <add>, %13, %cst_10 [2] : vector<2x8x128xf32> to vector<2x8xf32>
    %c0_11 = arith.constant 0 : index
    %c0_12 = arith.constant 0 : index
    %15 = vector.load %arg6[%c0_11, %c0_12] : memref<1x128xf32, #tpu.memory_space<vmem>>, vector<1x128xf32>
    %16 = vector.shape_cast %15 : vector<1x128xf32> to vector<1x1x128xf32>
    %17 = vector.broadcast %16 : vector<1x1x128xf32> to vector<2x8x128xf32>
    %18 = arith.mulf %12, %17 : vector<2x8x128xf32>
    %cst_13 = arith.constant dense<0.000000e+00> : vector<2x8xf32>
    %19 = vector.multi_reduction <add>, %18, %cst_13 [2] : vector<2x8x128xf32> to vector<2x8xf32>
    %cst_14 = arith.constant 9.99999996E-13 : f32
    %20 = vector.broadcast %cst_14 : f32 to vector<2x8xf32>
    %21 = arith.addf %14, %20 : vector<2x8xf32>
    %22 = math.rsqrt %21 : vector<2x8xf32>
    %23 = arith.mulf %19, %22 : vector<2x8xf32>
    %24 = arith.addf %23, %2 : vector<2x8xf32>
    %cst_15 = arith.constant dense<0xFF800000> : vector<2xf32>
    %25 = vector.multi_reduction <maximumf>, %24, %cst_15 [1] : vector<2x8xf32> to vector<2xf32>
    %26 = vector.shape_cast %25 : vector<2xf32> to vector<2x1xf32>
    %27 = vector.broadcast %26 : vector<2x1xf32> to vector<2x8xf32>
    %28 = arith.subf %24, %27 : vector<2x8xf32>
    %29 = math.exp %28 : vector<2x8xf32>
    %cst_16 = arith.constant dense<0.000000e+00> : vector<2xf32>
    %30 = vector.multi_reduction <add>, %29, %cst_16 [1] : vector<2x8xf32> to vector<2xf32>
    %31 = vector.shape_cast %30 : vector<2xf32> to vector<2x1xf32>
    %32 = vector.broadcast %31 : vector<2x1xf32> to vector<2x8xf32>
    %33 = arith.divf %29, %32 : vector<2x8xf32>
    %c0_17 = arith.constant 0 : index
    %c0_18 = arith.constant 0 : index
    %34 = vector.load %arg8[%c0_17, %c0_18] : memref<2x8xf32, #tpu.memory_space<vmem>>, vector<2x8xf32>
    tpu.vector_store %arg8[%c0_17, %c0_18], %33 {strides = array<i32>} : memref<2x8xf32, #tpu.memory_space<vmem>>, vector<2x8xf32>,
    %35 = vector.shape_cast %33 : vector<2x8xf32> to vector<2x1x8xf32>
    %36 = arith.truncf %35 : vector<2x1x8xf32> to vector<2x1x8xbf16>
    "tpu.trace_start"() <{level = 10 : i32, message = "bqr,brf->bqf"}> : () -> ()
    %cst_19 = arith.constant dense<0.000000e+00> : vector<2x1x128xf32>
    %37 = tpu.matmul %36, %0, %cst_19 {dimension_numbers = #tpu.dot_dimension_numbers<[2], [1], [1], [2], [0, 0, 0, 1, 1, 2], [0], [0]>} : vector<2x1x8xbf16>, vector<2x8x128xbf16>, vector<2x1x128xf32> -> vector<2x1x128xf32>
    "tpu.trace_stop"() : () -> ()
    %38 = vector.shape_cast %37 : vector<2x1x128xf32> to vector<2x128xf32>
    %c0_20 = arith.constant 0 : index
    %c0_21 = arith.constant 0 : index
    %39 = vector.load %arg7[%c0_20, %c0_21] : memref<2x128xf32, #tpu.memory_space<vmem>>, vector<2x128xf32>
    tpu.vector_store %arg7[%c0_20, %c0_21], %38 {strides = array<i32>} : memref<2x128xf32, #tpu.memory_space<vmem>>, vector<2x128xf32>,
    return
  }
  func.func @transform_0(%arg0: i32) -> (i32, i32, i32) {
    %c0_i32 = arith.constant 0 : i32
    %c0_i32_0 = arith.constant 0 : i32
    %c0_i32_1 = arith.constant 0 : i32
    return %arg0, %c0_i32, %c0_i32_0 : i32, i32, i32
  }
  func.func @transform_1(%arg0: i32) -> (i32, i32) {
    %c0_i32 = arith.constant 0 : i32
    %c0_i32_0 = arith.constant 0 : i32
    return %arg0, %c0_i32 : i32, i32
  }
  func.func @transform_2(%arg0: i32) -> (i32, i32) {
    %c0_i32 = arith.constant 0 : i32
    %c0_i32_0 = arith.constant 0 : i32
    return %arg0, %c0_i32 : i32, i32
  }
  func.func @transform_3(%arg0: i32) -> (i32, i32) {
    %c0_i32 = arith.constant 0 : i32
    %c0_i32_0 = arith.constant 0 : i32
    %c0_i32_1 = arith.constant 0 : i32
    return %c0_i32, %c0_i32_0 : i32, i32
  }
  func.func @transform_4(%arg0: i32) -> (i32, i32) {
    %c0_i32 = arith.constant 0 : i32
    %c0_i32_0 = arith.constant 0 : i32
    %c0_i32_1 = arith.constant 0 : i32
    return %c0_i32, %c0_i32_0 : i32, i32
  }
  func.func @transform_5(%arg0: i32) -> (i32, i32) {
    %c0_i32 = arith.constant 0 : i32
    %c0_i32_0 = arith.constant 0 : i32
    %c0_i32_1 = arith.constant 0 : i32
    return %c0_i32, %c0_i32_0 : i32, i32
  }
  func.func @transform_6(%arg0: i32) -> (i32, i32) {
    %c0_i32 = arith.constant 0 : i32
    %c0_i32_0 = arith.constant 0 : i32
    return %arg0, %c0_i32 : i32, i32
  }
  func.func @transform_7(%arg0: i32) -> (i32, i32) {
    %c0_i32 = arith.constant 0 : i32
    %c0_i32_0 = arith.constant 0 : i32
    return %arg0, %c0_i32 : i32, i32
  }
}

</mosaic_0001>

<llo_original>
// kernel: tpu_custom_call.1
$region0: #{tpu_custom_call.1}
  #allocation0 [shape = 'u32[]', space=smem, size = 0x4, offset = 0x4, fixed_abs, tag = 'smem constant byte address 0x4 - core index']
  #allocation1 [shape = 'u32[72,128]{1,0:T(1,128)}', space=vmem, size = 0x9000, scoped, tag = 'internal scratch']
  %s0 = inlined_call_operand.hbm [shape: bf16[2,8,128], index: 0, kind: input, shape index: {}]
  %s1 = inlined_call_operand.hbm [shape: f32[2,128], index: 1, kind: input, shape index: {}]
  %s2 = inlined_call_operand.hbm [shape: f32[2,8], index: 2, kind: input, shape index: {}]
  %s3 = inlined_call_operand.hbm [shape: bf16[128,128], index: 3, kind: input, shape index: {}]
  %s4 = inlined_call_operand.vmem [shape: f32[1,128], index: 4, kind: input, shape index: {}]
  %s5 = inlined_call_operand.vmem [shape: f32[1,128], index: 5, kind: input, shape index: {}]
  %s6 = inlined_call_operand.hbm [shape: f32[2,128], index: 6, kind: output, shape index: {0}]
  %s7 = inlined_call_operand.hbm [shape: f32[2,8], index: 7, kind: output, shape index: {1}]
  %8 = xla_tuple %s6, %s7
  %s9 = sld [smem:[#allocation0]]
  $region58: #{tpu_custom_call.1} parent=0
    _
  %s11 = ssub.s32 1, %s9
  %s12 = scalar_select 0, %s11, %s9
  $region1: #{tpu_custom_call.1} parent=0
    #allocation2 [shape = 'u8[4096]{0}', space=vmem, size = 0x1000, scoped, tag = 'input window, operand 0, single buffered']
    #allocation3 [shape = 's32[1]{0}', space=sflag, size = 0x4, scoped, tag = 'scoped memory for tpu_custom_call.1']
    #allocation4 [shape = 's32[1]{0}', space=sflag, size = 0x4, scoped, tag = 'scoped memory for tpu_custom_call.1']
    #allocation5 [shape = 'u8[1024]{0}', space=vmem, size = 0x400, scoped, tag = 'input window, operand 1, single buffered']
    #allocation6 [shape = 's32[1]{0}', space=sflag, size = 0x4, scoped, tag = 'scoped memory for tpu_custom_call.1']
    #allocation7 [shape = 'u8[1024]{0}', space=vmem, size = 0x400, scoped, tag = 'input window, operand 2, single buffered']
    #allocation8 [shape = 'u8[32768]{0}', space=vmem, size = 0x8000, scoped, tag = 'input window, operand 3, single buffered']
    #allocation9 [shape = 's32[1]{0}', space=sflag, size = 0x4, scoped, tag = 'scoped memory for tpu_custom_call.1']
    #allocation10 [shape = 'u8[1024]{0}', space=vmem, size = 0x400, scoped, tag = 'output window, operand 0, single buffered']
    #allocation11 [shape = 'u8[1024]{0}', space=vmem, size = 0x400, scoped, tag = 'output window, operand 1, single buffered']
    #allocation12 [shape = 's32[1]{0}', space=sflag, size = 0x4, scoped, tag = 'scoped memory for tpu_custom_call.1']
    %13 = vsyncpa [#allocation3], 0
    %14 = vsyncpa [#allocation6], 0
    %15 = vsyncpa [#allocation9], 0
    %16 = vsyncpa [#allocation4], 0
    %17 = vsyncpa [#allocation12], 0
    // Predicated region
    $region2: #{tpu_custom_call.1} parent=1 // pred_check
      _
    $region3: #{tpu_custom_call.1} parent=1 // pred_check_branch
      %19 = sbr.rel (0) target = $region5
    $region4: #{tpu_custom_call.1} parent=1 // pred_region
      %21 = vsyncadd [#allocation3], 0
      %s22 = sshll.u32 %s0, 4
      %s23 = int_to_ptr.hbm [resolvable:$true] %s22
      %s24 = sshll.u32 [#allocation2], 4
      %s25 = int_to_ptr.vmem [resolvable:$true] %s24
      %30 = dma.hbm_to_vmem [thread:$0]  %s23, 128, %s25, [#allocation3], 64, 64, 4
    $region5: #{tpu_custom_call.1} parent=1 // pred_fallthru
      _
    // Predicated region
    $region6: #{tpu_custom_call.1} parent=1 // pred_check
      _
    $region7: #{tpu_custom_call.1} parent=1 // pred_check_branch
      %32 = sbr.rel (0) target = $region9
    $region8: #{tpu_custom_call.1} parent=1 // pred_region
      %34 = vsyncadd [#allocation6], 0
      %s36 = sshll.u32 %s1, 4
      %s37 = int_to_ptr.hbm [resolvable:$true] %s36
      %s38 = sshll.u32 [#allocation5], 4
      %s39 = int_to_ptr.vmem [resolvable:$true] %s38
      %41 = dma.hbm_to_vmem [thread:$0]  %s37, 32, %s39, [#allocation6]
    $region9: #{tpu_custom_call.1} parent=1 // pred_fallthru
      _
    // Predicated region
    $region10: #{tpu_custom_call.1} parent=1 // pred_check
      _
    $region11: #{tpu_custom_call.1} parent=1 // pred_check_branch
      %43 = sbr.rel (0) target = $region13
    $region12: #{tpu_custom_call.1} parent=1 // pred_region
      %45 = vsyncadd [#allocation6], 0
      %s47 = sshll.u32 %s2, 4
      %s48 = int_to_ptr.hbm [resolvable:$true] %s47
      %s49 = sshll.u32 [#allocation7], 4
      %s50 = int_to_ptr.vmem [resolvable:$true] %s49
      %52 = dma.hbm_to_vmem [thread:$0]  %s48, 32, %s50, [#allocation6]
    $region13: #{tpu_custom_call.1} parent=1 // pred_fallthru
      _
    // Predicated region
    $region14: #{tpu_custom_call.1} parent=1 // pred_check
      _
    $region15: #{tpu_custom_call.1} parent=1 // pred_check_branch
      %54 = sbr.rel (0) target = $region17
    $region16: #{tpu_custom_call.1} parent=1 // pred_region
      %56 = vsyncadd [#allocation9], 0
      %s57 = sshll.u32 %s3, 4
      %s58 = int_to_ptr.hbm [resolvable:$true] %s57
      %s59 = sshll.u32 [#allocation8], 4
      %s60 = int_to_ptr.vmem [resolvable:$true] %s59
      %65 = dma.hbm_to_vmem [thread:$0]  %s58, 1024, %s60, [#allocation9], 64, 64, 4
    $region17: #{tpu_custom_call.1} parent=1 // pred_fallthru
      _
    // Predicated region
    $region18: #{tpu_custom_call.1} parent=1 // pred_check
      _
    $region19: #{tpu_custom_call.1} parent=1 // pred_check_branch
      %67 = sbr.rel (0) target = $region21
    $region20: #{tpu_custom_call.1} parent=1 // pred_region
      _
    $region21: #{tpu_custom_call.1} parent=1 // pred_fallthru
      _
    // Predicated region
    $region22: #{tpu_custom_call.1} parent=1 // pred_check
      _
    $region23: #{tpu_custom_call.1} parent=1 // pred_check_branch
      %69 = sbr.rel (0) target = $region25
    $region24: #{tpu_custom_call.1} parent=1 // pred_region
      _
    $region25: #{tpu_custom_call.1} parent=1 // pred_fallthru
      _
    // Predicated region
    $region26: #{tpu_custom_call.1} parent=1 // pred_check
      _
    $region27: #{tpu_custom_call.1} parent=1 // pred_check_branch
      %71 = sbr.rel (0) target = $region29
    $region28: #{tpu_custom_call.1} parent=1 // pred_region
      %73 = dma.done [#allocation3], 128
    $region29: #{tpu_custom_call.1} parent=1 // pred_fallthru
      _
    // Predicated region
    $region30: #{tpu_custom_call.1} parent=1 // pred_check
      _
    $region31: #{tpu_custom_call.1} parent=1 // pred_check_branch
      %75 = sbr.rel (0) target = $region33
    $region32: #{tpu_custom_call.1} parent=1 // pred_region
      %77 = dma.done [#allocation6], 32
    $region33: #{tpu_custom_call.1} parent=1 // pred_fallthru
      _
    // Predicated region
    $region34: #{tpu_custom_call.1} parent=1 // pred_check
      _
    $region35: #{tpu_custom_call.1} parent=1 // pred_check_branch
      %79 = sbr.rel (0) target = $region37
    $region36: #{tpu_custom_call.1} parent=1 // pred_region
      %81 = dma.done [#allocation6], 32
    $region37: #{tpu_custom_call.1} parent=1 // pred_fallthru
      _
    // Predicated region
    $region38: #{tpu_custom_call.1} parent=1 // pred_check
      _
    $region39: #{tpu_custom_call.1} parent=1 // pred_check_branch
      %83 = sbr.rel (0) target = $region41
    $region40: #{tpu_custom_call.1} parent=1 // pred_region
      %85 = dma.done [#allocation9], 1024
    $region41: #{tpu_custom_call.1} parent=1 // pred_fallthru
      _
    %v87 = vld [vmem:[#allocation2] sm:$0xf]
    %v88 = vld [vmem:[#allocation2 + $0x4] sm:$0xf]
    %v89 = vld [vmem:[#allocation5] sm:$0x3]
    %v90 = vld [vmem:[#allocation7] sm:$0x3]
    %v91 = vld [vmem:[#allocation8] sm:$0xf]
    %v92 = vld [vmem:[#allocation8 + $0x4] sm:$0xf]
    %v93 = vld [vmem:[#allocation8 + $0x8] sm:$0xf]
    %v94 = vld [vmem:[#allocation8 + $0xc] sm:$0xf]
    %v95 = vld [vmem:[#allocation8 + $0x10] sm:$0xf]
    %v96 = vld [vmem:[#allocation8 + $0x14] sm:$0xf]
    %v97 = vld [vmem:[#allocation8 + $0x18] sm:$0xf]
    %v98 = vld [vmem:[#allocation8 + $0x1c] sm:$0xf]
    %v99 = vld [vmem:[#allocation8 + $0x20] sm:$0xf]
    %v100 = vld [vmem:[#allocation8 + $0x24] sm:$0xf]
    %v101 = vld [vmem:[#allocation8 + $0x28] sm:$0xf]
    %v102 = vld [vmem:[#allocation8 + $0x2c] sm:$0xf]
    %v103 = vld [vmem:[#allocation8 + $0x30] sm:$0xf]
    %v104 = vld [vmem:[#allocation8 + $0x34] sm:$0xf]
    %v105 = vld [vmem:[#allocation8 + $0x38] sm:$0xf]
    %v106 = vld [vmem:[#allocation8 + $0x3c] sm:$0xf]
    %v107 = vld [vmem:[%s4] sm:$0x1]
    %v109 = vperm.slane %v107, 0
    %v113 = vunpack.c.l.b16 %v87
    %v114 = vunpack.c.l.b16 %v88
    %v115 = vpack.c.b16 %v114, %v113
    %v133 = vunpack.c.l.b16 %v91
    %v134 = vunpack.c.l.b16 %v92
    %v135 = vunpack.c.l.b16 %v93
    %v136 = vunpack.c.l.b16 %v94
    %v137 = vunpack.c.l.b16 %v95
    %v138 = vunpack.c.l.b16 %v96
    %v139 = vunpack.c.l.b16 %v97
    %v140 = vunpack.c.l.b16 %v98
    %v141 = vunpack.c.l.b16 %v99
    %v142 = vunpack.c.l.b16 %v100
    %v143 = vunpack.c.l.b16 %v101
    %v144 = vunpack.c.l.b16 %v102
    %v145 = vunpack.c.l.b16 %v103
    %v146 = vunpack.c.l.b16 %v104
    %v147 = vunpack.c.l.b16 %v105
    %v148 = vunpack.c.l.b16 %v106
    %v149 = vpack.c.b16 %v134, %v133
    %v150 = vpack.c.b16 %v136, %v135
    %v151 = vpack.c.b16 %v138, %v137
    %v152 = vpack.c.b16 %v140, %v139
    %v153 = vpack.c.b16 %v142, %v141
    %v154 = vpack.c.b16 %v144, %v143
    %v155 = vpack.c.b16 %v146, %v145
    %v156 = vpack.c.b16 %v148, %v147
    %165 = vmatpush.bf16.msra.mxu0 %v156
    %166 = vmatpush.bf16.msra.mxu0 %v155
    %167 = vmatpush.bf16.msra.mxu0 %v154
    %168 = vmatpush.bf16.msra.mxu0 %v153
    %169 = vmatpush.bf16.msra.mxu0 %v152
    %170 = vmatpush.bf16.msra.mxu0 %v151
    %171 = vmatpush.bf16.msra.mxu0 %v150
    %172 = vmatpush.bf16.msra.mxu0 %v149
    %173 = vmatmul.bf16.gmra.mxu0 %v115
    %v174 = vpop.f32.mrf.mxu0
    %v175 = vadd.f32 %v109, %v174
    %v176 = vpop.f32.mrf.mxu0
    %v177 = vadd.f32 %v109, %v176
    %178 = vdwg.mxu0
    %v180 = vrot.slane %v89, 1
    %v181 = vperm.slane %v89, 0
    %v182 = vperm.slane %v180, 0
    %v185 = vmul.f32 %v175, %v181
    %v186 = vmul.f32 %v177, %v182
    %v187 = vmul.f32 %v185, %v185
    %v188 = vmul.f32 %v186, %v186
    %189 = vadd.xlane.f32.xlu0 %v187
    %v190 = vpop.xlane.xlu0 %189
    %191 = vadd.xlane.f32.xlu0 %v188
    %v192 = vpop.xlane.xlu0 %191
    %v193 = vld [vmem:[%s5] sm:$0x1]
    %v195 = vperm.slane %v193, 0
    %v197 = vmul.f32 %v185, %v195
    %v198 = vmul.f32 %v186, %v195
    %199 = vadd.xlane.f32.xlu0 %v197
    %v200 = vpop.xlane.xlu0 %199
    %201 = vadd.xlane.f32.xlu0 %v198
    %v202 = vpop.xlane.xlu0 %201
    %v203 = vadd.f32 %v190, 1e-12
    %v204 = vadd.f32 %v192, 1e-12
    %v205 = vrsqrt.pop %v203
    %v206 = vmul.f32 %v205, %v203
    %v207 = vmul.f32 %v206, %v205
    %v208 = vmul.f32 0.5, %v207
    %v209 = vsub.f32 1.5, %v208
    %v210 = vmul.f32 %v205, %v209
    %vm211 = vweird.f32 %v203
    %vm212 = vweird.f32 %v205
    %vm213 = vmor %vm211, %vm212
    %v214 = vsel %vm213, %v205, %v210
    %v215 = vrsqrt.pop %v204
    %v216 = vmul.f32 %v215, %v204
    %v217 = vmul.f32 %v216, %v215
    %v218 = vmul.f32 0.5, %v217
    %v219 = vsub.f32 1.5, %v218
    %v220 = vmul.f32 %v215, %v219
    %vm221 = vweird.f32 %v204
    %vm222 = vweird.f32 %v215
    %vm223 = vmor %vm221, %vm222
    %v224 = vsel %vm223, %v215, %v220
    %v225 = vmul.f32 %v200, %v214
    %v226 = vmul.f32 %v202, %v224
    %v228 = vperm.slane %v90, 0
    %v229 = vlaneseq
    %v230 = vshrl.u32 %v229, 7
    %232 = vset.pattern.permute.xlu0 %v230
    %233 = vperm.xlu0 %232, %v228
    %v234 = vpop.permute.xlu0 %233
    %v235 = vperm.slane %v90, 1
    %v236 = vlaneseq
    %v237 = vshrl.u32 %v236, 7
    %239 = vset.pattern.permute.xlu0 %v237
    %240 = vperm.xlu0 %239, %v235
    %v241 = vpop.permute.xlu0 %240
    %v244 = vadd.f32 %v225, %v234
    %v245 = vadd.f32 %v226, %v241
    %248 = vset.pattern.permute.xlu0 0
    %249 = vperm.xlu0 %248, %v244
    %v250 = vpop.permute.xlu0 %249
    %251 = vset.pattern.permute.xlu0 0
    %252 = vperm.xlu0 %251, %v245
    %v253 = vpop.permute.xlu0 %252
    %v254 = vlaneseq
    %v255 = vand.u32 %v254, 127
    %v256 = vperm.slane %v250, %v255
    %v257 = vperm.slane %v253, %v255
    %vm258 = vcmask 1041409
    %v259 = vsel %vm258, %v257, %v256
    %vm261 = vcmask 58368
    %v262 = vsel %vm261, %v259, -inf
    %263 = vmax.xlane.f32.xlu0 %v262
    %v264 = vpop.xlane.xlu0 %263
    %v266 = vperm.slane %v264, 0
    %v267 = vperm.slane %v264, 1
    %v270 = vsub.f32 %v244, %v266
    %v271 = vsub.f32 %v245, %v267
    %v272 = vmul.f32 %v270, 1.442695
    %v273 = vpow.pop %v272
    %v274 = vmul.f32 %v271, 1.442695
    %v275 = vpow.pop %v274
    %278 = vset.pattern.permute.xlu0 0
    %279 = vperm.xlu0 %278, %v273
    %v280 = vpop.permute.xlu0 %279
    %281 = vset.pattern.permute.xlu0 0
    %282 = vperm.xlu0 %281, %v275
    %v283 = vpop.permute.xlu0 %282
    %v284 = vperm.slane %v280, %v255
    %v285 = vperm.slane %v283, %v255
    %v286 = vsel %vm258, %v285, %v284
    %v288 = vsel %vm261, %v286, 0.0
    %289 = vadd.xlane.f32.xlu0 %v288
    %v290 = vpop.xlane.xlu0 %289
    %v292 = vperm.slane %v290, 0
    %v293 = vperm.slane %v290, 1
    %v296 = vrcp.pop %v292
    %v297 = vmul.f32 %v292, %v296
    %v298 = vsub.f32 1.0, %v297
    %v299 = vmul.f32 %v296, %v298
    %v300 = vadd.f32 %v296, %v299
    %vm301 = vweird.f32 %v292
    %vm302 = vweird.f32 %v296
    %vm303 = vmor %vm301, %vm302
    %v304 = vsel %vm303, %v296, %v300
    %v305 = vand.u32 2147483647, %v292
    %vm306 = vcmp.eq.f32.partialorder %v305, 8.507059e+37
    %v307 = vand.u32 %v292, 2147483648
    %v308 = vor.u32 1.1754944e-38, %v307
    %v309 = vsel %vm306, %v308, %v304
    %v310 = vmul.f32 %v273, %v309
    %v311 = vrcp.pop %v293
    %v312 = vmul.f32 %v293, %v311
    %v313 = vsub.f32 1.0, %v312
    %v314 = vmul.f32 %v311, %v313
    %v315 = vadd.f32 %v311, %v314
    %vm316 = vweird.f32 %v293
    %vm317 = vweird.f32 %v311
    %vm318 = vmor %vm316, %vm317
    %v319 = vsel %vm318, %v311, %v315
    %v320 = vand.u32 2147483647, %v293
    %vm321 = vcmp.eq.f32.partialorder %v320, 8.507059e+37
    %v322 = vand.u32 %v293, 2147483648
    %v323 = vor.u32 1.1754944e-38, %v322
    %v324 = vsel %vm321, %v323, %v319
    %v325 = vmul.f32 %v275, %v324
    %328 = vset.pattern.permute.xlu0 0
    %329 = vperm.xlu0 %328, %v310
    %v330 = vpop.permute.xlu0 %329
    %331 = vset.pattern.permute.xlu0 0
    %332 = vperm.xlu0 %331, %v325
    %v333 = vpop.permute.xlu0 %332
    %v334 = vperm.slane %v330, %v255
    %v335 = vperm.slane %v333, %v255
    %v336 = vsel %vm258, %v335, %v334
    %338 = vst.msk [vmem:[#allocation11] sm:$0x3] %vm261, %v336
    %v339 = vpack.c.bf16 %v310, %v310
    %v340 = vpack.c.bf16 %v325, %v325
    %v342 = vunpack.c.l.b16 %v339
    %v343 = vpack.c.b16 %v342, %v342
    %v344 = vunpack.c.l.b16 %v343
    %345 = vset.pattern.permute.xlu0 0
    %346 = vperm.xlu0 %345, %v344
    %v347 = vpop.permute.xlu0 %346
    %v348 = vperm.slane %v347, %v255
    %v349 = vpack.c.b16 %v348, %v348
    %vm350 = vcmask 64512
    %v352 = vsel %vm350, %v349, 0
    %vm354 = vcmask 1043456
    %v356 = vsel %vm354, %v87, 0
    %358 = vmatpush.bf16.msra.mxu0 0
    %359 = vmatpush.bf16.msra.mxu0 0
    %360 = vmatpush.bf16.msra.mxu0 0
    %361 = vmatpush.bf16.msra.mxu0 0
    %362 = vmatpush.bf16.msra.mxu0 0
    %363 = vmatpush.bf16.msra.mxu0 0
    %364 = vmatpush.bf16.msra.mxu0 0
    %365 = vmatpush.bf16.msra.mxu0 %v356
    %366 = vmatmul.bf16.gmra.mxu0 %v352
    %v367 = vpop.f32.mrf.mxu0
    %v368 = vadd.f32 0.0, %v367
    %v369 = vpop.f32.mrf.mxu0
    %370 = vdwg.mxu0
    %v372 = vunpack.c.l.b16 %v340
    %v373 = vpack.c.b16 %v372, %v372
    %v374 = vunpack.c.l.b16 %v373
    %375 = vset.pattern.permute.xlu0 0
    %376 = vperm.xlu0 %375, %v374
    %v377 = vpop.permute.xlu0 %376
    %v378 = vperm.slane %v377, %v255
    %v379 = vpack.c.b16 %v378, %v378
    %v381 = vsel %vm350, %v379, 0
    %v384 = vsel %vm354, %v88, 0
    %386 = vmatpush.bf16.msra.mxu0 0
    %387 = vmatpush.bf16.msra.mxu0 0
    %388 = vmatpush.bf16.msra.mxu0 0
    %389 = vmatpush.bf16.msra.mxu0 0
    %390 = vmatpush.bf16.msra.mxu0 0
    %391 = vmatpush.bf16.msra.mxu0 0
    %392 = vmatpush.bf16.msra.mxu0 0
    %393 = vmatpush.bf16.msra.mxu0 %v384
    %394 = vmatmul.bf16.gmra.mxu0 %v381
    %v395 = vpop.f32.mrf.mxu0
    %v396 = vadd.f32 0.0, %v395
    %v397 = vpop.f32.mrf.mxu0
    %398 = vdwg.mxu0
    %v401 = vrot.slane %v396, 7
    %v402 = vsel %vm258, %v401, %v368
    %404 = vst [vmem:[#allocation10] sm:$0x3] %v402
    // Predicated region
    $region42: #{tpu_custom_call.1} parent=1 // pred_check
      _
    $region43: #{tpu_custom_call.1} parent=1 // pred_check_branch
      %406 = sbr.rel (0) target = $region45
    $region44: #{tpu_custom_call.1} parent=1 // pred_region
      %408 = vsyncadd [#allocation4], 0
      %s410 = sshll.u32 [#allocation10], 4
      %s411 = int_to_ptr.vmem [resolvable:$true] %s410
      %s412 = sshll.u32 %s6, 4
      %s413 = int_to_ptr.hbm [resolvable:$true] %s412
      %415 = dma.vmem_to_hbm [thread:$0]  %s411, 32, %s413, [#allocation4]
    $region45: #{tpu_custom_call.1} parent=1 // pred_fallthru
      _
    // Predicated region
    $region46: #{tpu_custom_call.1} parent=1 // pred_check
      _
    $region47: #{tpu_custom_call.1} parent=1 // pred_check_branch
      %417 = sbr.rel (0) target = $region49
    $region48: #{tpu_custom_call.1} parent=1 // pred_region
      %419 = vsyncadd [#allocation12], 0
      %s421 = sshll.u32 [#allocation11], 4
      %s422 = int_to_ptr.vmem [resolvable:$true] %s421
      %s423 = sshll.u32 %s7, 4
      %s424 = int_to_ptr.hbm [resolvable:$true] %s423
      %426 = dma.vmem_to_hbm [thread:$0]  %s422, 32, %s424, [#allocation12]
    $region49: #{tpu_custom_call.1} parent=1 // pred_fallthru
      _
    // Predicated region
    $region50: #{tpu_custom_call.1} parent=1 // pred_check
      _
    $region51: #{tpu_custom_call.1} parent=1 // pred_check_branch
      %428 = sbr.rel (0) target = $region53
    $region52: #{tpu_custom_call.1} parent=1 // pred_region
      %430 = dma.done [#allocation4], 32
    $region53: #{tpu_custom_call.1} parent=1 // pred_fallthru
      _
    // Predicated region
    $region54: #{tpu_custom_call.1} parent=1 // pred_check
      _
    $region55: #{tpu_custom_call.1} parent=1 // pred_check_branch
      %432 = sbr.rel (0) target = $region57
    $region56: #{tpu_custom_call.1} parent=1 // pred_region
      %434 = dma.done [#allocation12], 32
    $region57: #{tpu_custom_call.1} parent=1 // pred_fallthru
      _
    %435 = vsyncpa [#allocation3], 1
    %436 = vsyncpa [#allocation6], 1
    %437 = vsyncpa [#allocation9], 1
    %438 = vsyncpa [#allocation4], 1
    %439 = vsyncpa [#allocation12], 1

</llo_original>
